<compile_context>
chip_gen: v7x
topology: tpu7x:2x2x1
jax: 0.10.0
libtpu: 0.0.40
codegen_flags: <defaults>
</compile_context>

<pallas_src>
import math

import jax
import jax.numpy as jnp
from jax import lax
from jax.experimental import pallas as pl
from jax.experimental.pallas import tpu as pltpu


def _time_embedding_kernel(t_ref, freqs_ref, w1_ref, b1_ref, w2_ref, b2_ref,
                           out_ref):
    """Fused: sinusoid -> linear1 -> exact GELU -> linear2 for one batch tile."""
    t = t_ref[...]                                    # (bb, 1) f32
    args = t * freqs_ref[...]                         # (bb, half_p) f32

    wdt = w1_ref.dtype                                # bf16 (default) or f32
    # Lane-axis concat; half_p is a multiple of 128 so this is vreg-aligned.
    e = jnp.concatenate([jnp.sin(args), jnp.cos(args)], axis=-1).astype(wdt)

    # Weights are stored pre-transposed (K, N): plain dot, f32 accumulation.
    h = jnp.dot(e, w1_ref[...],
                preferred_element_type=jnp.float32) + b1_ref[...]   # (bb, 4H)

    # Exact erf GELU == torch.nn.GELU() default.
    h = 0.5 * h * (1.0 + lax.erf(h * (1.0 / math.sqrt(2.0))))

    out = jnp.dot(h.astype(w2_ref.dtype), w2_ref[...],
                  preferred_element_type=jnp.float32) + b2_ref[...]  # (bb, H)
    out_ref[...] = out.astype(out_ref.dtype)


def init_time_embedding_params(w1, b1, w2, b2, *, weight_dtype=jnp.bfloat16):
    """One-time parameter prep (torch nn.Linear layouts in, kernel-ready out).

    Args:
      w1: (4H, H) linear1 weight (torch out_features x in_features layout).
      b1: (4H,)   linear1 bias.
      w2: (H, 4H) linear2 weight.
      b2: (H,)    linear2 bias.
      weight_dtype: storage dtype for the weight matrices (bf16 default; f32
        for exact parity). MXU accumulation is always f32.
    """
    H4, H = w1.shape
    assert w2.shape == (H, H4) and b1.shape == (H4,) and b2.shape == (H,)
    assert H % 2 == 0, "hidden_dim must be even (sin/cos halves)"
    half = H // 2
    assert half > 1, "hidden_dim must be >= 4 (half_dim - 1 divides)"

    # Pad the layer-1 contraction dim so the sin/cos blocks are each a multiple
    # of 128 lanes.  Padded freq columns are 0; the matching weight ROWS are 0,
    # so padded columns (sin(0)=0, cos(0)=1) contribute nothing.
    half_p = ((half + 127) // 128) * 128

    scale = math.log(10000.0) / (half - 1)
    freqs = jnp.exp(jnp.arange(half, dtype=jnp.float32) * -scale)
    freqs_p = jnp.zeros((1, half_p), jnp.float32).at[0, :half].set(freqs)

    w1f = jnp.asarray(w1, jnp.float32)
    # MXU-native (K, N) layout: rows are [sin cols | pad | cos cols | pad].
    w1_t = jnp.zeros((2 * half_p, H4), jnp.float32)
    w1_t = w1_t.at[:half, :].set(w1f[:, :half].T)
    w1_t = w1_t.at[half_p:half_p + half, :].set(w1f[:, half:].T)

    return dict(
        freqs=freqs_p,                                          # (1, half_p) f32
        w1=w1_t.astype(weight_dtype),                           # (2*half_p, 4H)
        b1=jnp.asarray(b1, jnp.float32).reshape(1, H4),
        w2=jnp.asarray(w2, jnp.float32).T.astype(weight_dtype),  # (4H, H)
        b2=jnp.asarray(b2, jnp.float32).reshape(1, H),
    )


def time_embedding(t, params):
    """Pallas TimeEmbedding forward: t (B,) -> (B, hidden_dim) f32."""
    freqs, w1, b1, w2, b2 = (params["freqs"], params["w1"], params["b1"],
                             params["w2"], params["b2"])

    B = t.shape[0]
    K1, H4 = w1.shape                       # K1 = 2 * half_p
    H = w2.shape[1]
    half_p = K1 // 2

    # Only per-call prep: cast timesteps to an f32 column (as the torch code).
    t2 = t.astype(jnp.float32).reshape(B, 1)

    wbytes = jnp.dtype(w1.dtype).itemsize
    weight_bytes = (w1.size + w2.size) * wbytes
    row_bytes = 4 * (1 + K1 + H4 + H)       # f32 activation traffic per row

    # Batch tiling: single grid step (weights DMA'd exactly once) unless the
    # batch is large enough that activation traffic rivals weight traffic; only
    # then tile at 256 rows and shard across TensorCores (v7x megacore).
    if B > 256 and B * row_bytes >= weight_bytes:
        bb = 256
        semantics = ("parallel",)
    else:
        bb = B
        semantics = ("arbitrary",)
    grid = (pl.cdiv(B, bb),)

    cost = pl.CostEstimate(
        flops=2 * B * K1 * H4 + 2 * B * H4 * H,
        transcendentals=B * (K1 + H4),      # sin + cos + erf
        bytes_accessed=weight_bytes + 4 * (B * (1 + H) + K1 + H4 + H),
    )

    # VMEM budget: constants are single-buffered (Buffered(1)), the small
    # t / out tiles double-buffered, plus room for the e / h intermediates.
    const_bytes = weight_bytes + 4 * (K1 + H4 + H)
    act_bytes = 2 * 4 * bb * (1 + H)
    scratch_bytes = 4 * bb * (K1 + H4)
    need = const_bytes + act_bytes + scratch_bytes + (2 << 20)
    try:
        phys = int(pltpu.get_tpu_info().vmem_capacity_bytes)
    except Exception:  # pragma: no cover - conservative fallback (v7x minimum)
        phys = 64 << 20
    vmem_limit = int(min(max(need, 32 << 20), phys - (4 << 20)))

    single = pl.Buffered(1)   # resident blocks: no benefit from double-buffering

    return pl.pallas_call(
        _time_embedding_kernel,
        out_shape=jax.ShapeDtypeStruct((B, H), jnp.float32),
        grid=grid,
        in_specs=[
            pl.BlockSpec((bb, 1), lambda i: (i, 0)),                              # t
            pl.BlockSpec((1, half_p), lambda i: (0, 0), pipeline_mode=single),    # freqs
            pl.BlockSpec((K1, H4), lambda i: (0, 0), pipeline_mode=single),       # W1 (K,N)
            pl.BlockSpec((1, H4), lambda i: (0, 0), pipeline_mode=single),        # b1
            pl.BlockSpec((H4, H), lambda i: (0, 0), pipeline_mode=single),        # W2 (K,N)
            pl.BlockSpec((1, H), lambda i: (0, 0), pipeline_mode=single),         # b2
        ],
        out_specs=pl.BlockSpec((bb, H), lambda i: (i, 0)),
        compiler_params=pltpu.CompilerParams(
            dimension_semantics=semantics,
            vmem_limit_bytes=vmem_limit,
        ),
        cost_estimate=cost,
    )(t2, freqs, w1, b1, w2, b2)


def _reference(t, w1, b1, w2, b2):
    """Pure-JAX reference reproducing the PyTorch forward exactly (f32)."""
    H = w1.shape[1]
    half = H // 2
    scale = math.log(10000.0) / (half - 1)
    freqs = jnp.exp(jnp.arange(half, dtype=jnp.float32) * -scale)
    e = t.astype(jnp.float32)[:, None] * freqs[None, :]
    e = jnp.concatenate([jnp.sin(e), jnp.cos(e)], axis=1)
    h = e @ w1.T + b1
    h = jax.nn.gelu(h, approximate=False)
    return h @ w2.T + b2


def _rel_err(a, b):
    return float(jnp.linalg.norm(a - b) / (jnp.linalg.norm(b) + 1e-12))


if __name__ == "__main__":
    key = jax.random.PRNGKey(0)

    def make_params(k, H):
        H4 = 4 * H
        k1, k2, k3, k4 = jax.random.split(k, 4)
        w1 = jax.random.normal(k1, (H4, H), jnp.float32) * 0.02
        b1 = jax.random.normal(k2, (H4,), jnp.float32) * 0.02
        w2 = jax.random.normal(k3, (H, H4), jnp.float32) * 0.02
        b2 = jax.random.normal(k4, (H,), jnp.float32) * 0.02
        return w1, b1, w2, b2

    # Case 1: hidden_dim=128 (the docstring example size), small batch,
    #         f32 weight storage (exact parity path).
    kp, kt, key = jax.random.split(key, 3)
    w1, b1, w2, b2 = make_params(kp, 128)
    t = jax.random.randint(kt, (8,), 0, 1000)
    ref = _reference(t, w1, b1, w2, b2)

    p_f32 = init_time_embedding_params(w1, b1, w2, b2, weight_dtype=jnp.float32)
    out = jax.block_until_ready(time_embedding(t, p_f32))
    assert out.shape == (8, 128)
    assert _rel_err(out, ref) < 5e-3, f"f32 rel err {_rel_err(out, ref)}"

    # Case 2: same weights, default bf16 storage (f32 MXU accumulation).
    p_bf16 = init_time_embedding_params(w1, b1, w2, b2)
    out_bf = jax.block_until_ready(time_embedding(t, p_bf16))
    assert out_bf.shape == (8, 128)
    assert _rel_err(out_bf, ref) < 3e-2, f"bf16 rel err {_rel_err(out_bf, ref)}"

    # Case 3: hidden_dim=64 (half not a multiple of 128 -> padded K path,
    #         output narrower than a lane) with a batch large enough to take
    #         the tiled / megacore-parallel grid path (partial last block).
    kp2, kt2, key = jax.random.split(key, 3)
    w1s, b1s, w2s, b2s = make_params(kp2, 64)
    t_big = jax.random.randint(kt2, (300,), 0, 1000)
    ref_big = _reference(t_big, w1s, b1s, w2s, b2s)

    p_small = init_time_embedding_params(w1s, b1s, w2s, b2s,
                                         weight_dtype=jnp.float32)
    out_big = jax.block_until_ready(time_embedding(t_big, p_small))
    assert out_big.shape == (300, 64)
    assert _rel_err(out_big, ref_big) < 5e-3, (
        f"tiled-grid rel err {_rel_err(out_big, ref_big)}")

    print("KERNEL_OK")
</pallas_src>

<mosaic_0001>
module attributes {stable_mosaic.version = 11 : i64} {
  func.func @_time_embedding_kernel(%arg0: i32, %arg1: memref<8x1xf32, #tpu.memory_space<vmem>>, %arg2: memref<1x128xf32, #tpu.memory_space<vmem>>, %arg3: memref<256x512xf32, #tpu.memory_space<vmem>>, %arg4: memref<1x512xf32, #tpu.memory_space<vmem>>, %arg5: memref<512x128xf32, #tpu.memory_space<vmem>>, %arg6: memref<1x128xf32, #tpu.memory_space<vmem>>, %arg7: memref<8x128xf32, #tpu.memory_space<vmem>>) attributes {dimension_semantics = [#tpu.dimension_semantics<arbitrary>], iteration_bounds = array<i64: 1>, scalar_prefetch = 0 : i64, scratch_operands = 0 : i64, tpu.core_type = #tpu.core_type<tc>, window_params = [{transform_indices = @transform_0, window_bounds = array<i64: 8, 1>}, {pipeline_mode = #tpu.pipeline_mode<synchronous>, transform_indices = @transform_1, window_bounds = array<i64: 1, 128>}, {pipeline_mode = #tpu.pipeline_mode<synchronous>, transform_indices = @transform_2, window_bounds = array<i64: 256, 512>}, {pipeline_mode = #tpu.pipeline_mode<synchronous>, transform_indices = @transform_3, window_bounds = array<i64: 1, 512>}, {pipeline_mode = #tpu.pipeline_mode<synchronous>, transform_indices = @transform_4, window_bounds = array<i64: 512, 128>}, {pipeline_mode = #tpu.pipeline_mode<synchronous>, transform_indices = @transform_5, window_bounds = array<i64: 1, 128>}, {transform_indices = @transform_6, window_bounds = array<i64: 8, 128>}]} {
    %c0 = arith.constant 0 : index
    %c0_0 = arith.constant 0 : index
    %0 = vector.load %arg1[%c0, %c0_0] : memref<8x1xf32, #tpu.memory_space<vmem>>, vector<8x1xf32>
    %c0_1 = arith.constant 0 : index
    %c0_2 = arith.constant 0 : index
    %1 = vector.load %arg2[%c0_1, %c0_2] : memref<1x128xf32, #tpu.memory_space<vmem>>, vector<1x128xf32>
    %2 = vector.broadcast %0 : vector<8x1xf32> to vector<8x128xf32>
    %3 = vector.broadcast %1 : vector<1x128xf32> to vector<8x128xf32>
    %4 = arith.mulf %2, %3 : vector<8x128xf32>
    %5 = math.sin %4 : vector<8x128xf32>
    %6 = math.cos %4 : vector<8x128xf32>
    %7 = tpu.concatenate %5, %6 in 1 : vector<8x128xf32>, vector<8x128xf32> -> vector<8x256xf32>
    %c0_3 = arith.constant 0 : index
    %c0_4 = arith.constant 0 : index
    %8 = vector.load %arg3[%c0_3, %c0_4] : memref<256x512xf32, #tpu.memory_space<vmem>>, vector<256x512xf32>
    %cst = arith.constant dense<0.000000e+00> : vector<8x512xf32>
    %9 = tpu.matmul %7, %8, %cst {dimension_numbers = #tpu.dot_dimension_numbers<[1], [0], [0], [1], [0, 0, 1, 1], [], []>} : vector<8x256xf32>, vector<256x512xf32>, vector<8x512xf32> -> vector<8x512xf32>
    %c0_5 = arith.constant 0 : index
    %c0_6 = arith.constant 0 : index
    %10 = vector.load %arg4[%c0_5, %c0_6] : memref<1x512xf32, #tpu.memory_space<vmem>>, vector<1x512xf32>
    %11 = vector.broadcast %10 : vector<1x512xf32> to vector<8x512xf32>
    %12 = arith.addf %9, %11 : vector<8x512xf32>
    %cst_7 = arith.constant 5.000000e-01 : f32
    %13 = vector.broadcast %cst_7 : f32 to vector<8x512xf32>
    %14 = arith.mulf %13, %12 : vector<8x512xf32>
    %cst_8 = arith.constant 0.707106769 : f32
    %15 = vector.broadcast %cst_8 : f32 to vector<8x512xf32>
    %16 = arith.mulf %12, %15 : vector<8x512xf32>
    %17 = math.erf %16 : vector<8x512xf32>
    %cst_9 = arith.constant 1.000000e+00 : f32
    %18 = vector.broadcast %cst_9 : f32 to vector<8x512xf32>
    %19 = arith.addf %18, %17 : vector<8x512xf32>
    %20 = arith.mulf %14, %19 : vector<8x512xf32>
    %c0_10 = arith.constant 0 : index
    %c0_11 = arith.constant 0 : index
    %21 = vector.load %arg5[%c0_10, %c0_11] : memref<512x128xf32, #tpu.memory_space<vmem>>, vector<512x128xf32>
    %cst_12 = arith.constant dense<0.000000e+00> : vector<8x128xf32>
    %22 = tpu.matmul %20, %21, %cst_12 {dimension_numbers = #tpu.dot_dimension_numbers<[1], [0], [0], [1], [0, 0, 1, 1], [], []>} : vector<8x512xf32>, vector<512x128xf32>, vector<8x128xf32> -> vector<8x128xf32>
    %c0_13 = arith.constant 0 : index
    %c0_14 = arith.constant 0 : index
    %23 = vector.load %arg6[%c0_13, %c0_14] : memref<1x128xf32, #tpu.memory_space<vmem>>, vector<1x128xf32>
    %24 = vector.broadcast %23 : vector<1x128xf32> to vector<8x128xf32>
    %25 = arith.addf %22, %24 : vector<8x128xf32>
    %c0_15 = arith.constant 0 : index
    %c0_16 = arith.constant 0 : index
    %26 = vector.load %arg7[%c0_15, %c0_16] : memref<8x128xf32, #tpu.memory_space<vmem>>, vector<8x128xf32>
    tpu.vector_store %arg7[%c0_15, %c0_16], %25 {strides = array<i32>} : memref<8x128xf32, #tpu.memory_space<vmem>>, vector<8x128xf32>,
    return
  }
  func.func @transform_0(%arg0: i32) -> (i32, i32) {
    %c0_i32 = arith.constant 0 : i32
    %c0_i32_0 = arith.constant 0 : i32
    return %arg0, %c0_i32 : i32, i32
  }
  func.func @transform_1(%arg0: i32) -> (i32, i32) {
    %c0_i32 = arith.constant 0 : i32
    %c0_i32_0 = arith.constant 0 : i32
    %c0_i32_1 = arith.constant 0 : i32
    return %c0_i32, %c0_i32_0 : i32, i32
  }
  func.func @transform_2(%arg0: i32) -> (i32, i32) {
    %c0_i32 = arith.constant 0 : i32
    %c0_i32_0 = arith.constant 0 : i32
    %c0_i32_1 = arith.constant 0 : i32
    return %c0_i32, %c0_i32_0 : i32, i32
  }
  func.func @transform_3(%arg0: i32) -> (i32, i32) {
    %c0_i32 = arith.constant 0 : i32
    %c0_i32_0 = arith.constant 0 : i32
    %c0_i32_1 = arith.constant 0 : i32
    return %c0_i32, %c0_i32_0 : i32, i32
  }
  func.func @transform_4(%arg0: i32) -> (i32, i32) {
    %c0_i32 = arith.constant 0 : i32
    %c0_i32_0 = arith.constant 0 : i32
    %c0_i32_1 = arith.constant 0 : i32
    return %c0_i32, %c0_i32_0 : i32, i32
  }
  func.func @transform_5(%arg0: i32) -> (i32, i32) {
    %c0_i32 = arith.constant 0 : i32
    %c0_i32_0 = arith.constant 0 : i32
    %c0_i32_1 = arith.constant 0 : i32
    return %c0_i32, %c0_i32_0 : i32, i32
  }
  func.func @transform_6(%arg0: i32) -> (i32, i32) {
    %c0_i32 = arith.constant 0 : i32
    %c0_i32_0 = arith.constant 0 : i32
    return %arg0, %c0_i32 : i32, i32
  }
}

</mosaic_0001>

<llo_original>
// kernel: tpu_custom_call.1
$region0: #{tpu_custom_call.1}
  #allocation0 [shape = 'u32[]', space=smem, size = 0x4, offset = 0x4, fixed_abs, tag = 'smem constant byte address 0x4 - core index']
  #allocation1 [shape = 'u32[144,128]{1,0:T(1,128)}', space=vmem, size = 0x12000, scoped, tag = 'internal scratch']
  %s0 = inlined_call_operand.vmem [shape: f32[8,1], index: 0, kind: input, shape index: {}]
  %s1 = inlined_call_operand.vmem [shape: f32[1,128], index: 1, kind: input, shape index: {}]
  %s2 = inlined_call_operand.hbm [shape: f32[256,512], index: 2, kind: input, shape index: {}]
  %s3 = inlined_call_operand.vmem [shape: f32[1,512], index: 3, kind: input, shape index: {}]
  %s4 = inlined_call_operand.hbm [shape: f32[512,128], index: 4, kind: input, shape index: {}]
  %s5 = inlined_call_operand.vmem [shape: f32[1,128], index: 5, kind: input, shape index: {}]
  %s6 = inlined_call_operand.hbm [shape: f32[8,128], index: 6, kind: output, shape index: {}]
  %s7 = sld [smem:[#allocation0]]
  $region42: #{tpu_custom_call.1} parent=0
    _
  %s9 = ssub.s32 1, %s7
  %s10 = scalar_select 0, %s9, %s7
  $region1: #{tpu_custom_call.1} parent=0
    #allocation2 [shape = 'u8[524288]{0}', space=vmem, size = 0x80000, scoped, tag = 'input window, operand 2, single buffered']
    #allocation3 [shape = 's32[1]{0}', space=sflag, size = 0x4, scoped, tag = 'scoped memory for tpu_custom_call.1']
    #allocation4 [shape = 's32[1]{0}', space=sflag, size = 0x4, scoped, tag = 'scoped memory for tpu_custom_call.1']
    #allocation5 [shape = 'u8[262144]{0}', space=vmem, size = 0x40000, scoped, tag = 'input window, operand 4, single buffered']
    #allocation6 [shape = 's32[1]{0}', space=sflag, size = 0x4, scoped, tag = 'scoped memory for tpu_custom_call.1']
    #allocation7 [shape = 'u8[4096]{0}', space=vmem, size = 0x1000, scoped, tag = 'output window, operand 0, single buffered']
    %11 = vsyncpa [#allocation3], 0
    %12 = vsyncpa [#allocation6], 0
    %13 = vsyncpa [#allocation4], 0
    // Predicated region
    $region2: #{tpu_custom_call.1} parent=1 // pred_check
      _
    $region3: #{tpu_custom_call.1} parent=1 // pred_check_branch
      %15 = sbr.rel (0) target = $region5
    $region4: #{tpu_custom_call.1} parent=1 // pred_region
      _
    $region5: #{tpu_custom_call.1} parent=1 // pred_fallthru
      _
    // Predicated region
    $region6: #{tpu_custom_call.1} parent=1 // pred_check
      _
    $region7: #{tpu_custom_call.1} parent=1 // pred_check_branch
      %17 = sbr.rel (0) target = $region9
    $region8: #{tpu_custom_call.1} parent=1 // pred_region
      _
    $region9: #{tpu_custom_call.1} parent=1 // pred_fallthru
      _
    // Predicated region
    $region10: #{tpu_custom_call.1} parent=1 // pred_check
      _
    $region11: #{tpu_custom_call.1} parent=1 // pred_check_branch
      %19 = sbr.rel (0) target = $region13
    $region12: #{tpu_custom_call.1} parent=1 // pred_region
      %s21 = ssub.s32 16384, 16384
      %22 = vsyncadd [#allocation3], %s21
      %s23 = sshll.u32 [#allocation2], 4
      %s24 = int_to_ptr.vmem [resolvable:$true] %s23
      %29 = dma.hbm_to_vmem [thread:$0]  %s2, 16384, %s24, [#allocation3], 512, 512, 32
    $region13: #{tpu_custom_call.1} parent=1 // pred_fallthru
      _
    // Predicated region
    $region14: #{tpu_custom_call.1} parent=1 // pred_check
      _
    $region15: #{tpu_custom_call.1} parent=1 // pred_check_branch
      %31 = sbr.rel (0) target = $region17
    $region16: #{tpu_custom_call.1} parent=1 // pred_region
      _
    $region17: #{tpu_custom_call.1} parent=1 // pred_fallthru
      _
    // Predicated region
    $region18: #{tpu_custom_call.1} parent=1 // pred_check
      _
    $region19: #{tpu_custom_call.1} parent=1 // pred_check_branch
      %33 = sbr.rel (0) target = $region21
    $region20: #{tpu_custom_call.1} parent=1 // pred_region
      %s35 = ssub.s32 8192, 8192
      %36 = vsyncadd [#allocation6], %s35
      %s37 = sshll.u32 [#allocation5], 4
      %s38 = int_to_ptr.vmem [resolvable:$true] %s37
      %43 = dma.hbm_to_vmem [thread:$0]  %s4, 8192, %s38, [#allocation6], 128, 128, 8
    $region21: #{tpu_custom_call.1} parent=1 // pred_fallthru
      _
    // Predicated region
    $region22: #{tpu_custom_call.1} parent=1 // pred_check
      _
    $region23: #{tpu_custom_call.1} parent=1 // pred_check_branch
      %45 = sbr.rel (0) target = $region25
    $region24: #{tpu_custom_call.1} parent=1 // pred_region
      _
    $region25: #{tpu_custom_call.1} parent=1 // pred_fallthru
      _
    // Predicated region
    $region26: #{tpu_custom_call.1} parent=1 // pred_check
      _
    $region27: #{tpu_custom_call.1} parent=1 // pred_check_branch
      %47 = sbr.rel (0) target = $region29
    $region28: #{tpu_custom_call.1} parent=1 // pred_region
      %48 = dma.done [#allocation3], 16384
    $region29: #{tpu_custom_call.1} parent=1 // pred_fallthru
      _
    // Predicated region
    $region30: #{tpu_custom_call.1} parent=1 // pred_check
      _
    $region31: #{tpu_custom_call.1} parent=1 // pred_check_branch
      %50 = sbr.rel (0) target = $region33
    $region32: #{tpu_custom_call.1} parent=1 // pred_region
      %51 = dma.done [#allocation6], 8192
    $region33: #{tpu_custom_call.1} parent=1 // pred_fallthru
      _
    %v52 = vld [vmem:[%s0] sm:$0xff]
    %v53 = vld [vmem:[%s1] sm:$0x1]
    %55 = vset.pattern.permute.xlu0 0
    %56 = vperm.xlu0 %55, %v52
    %v57 = vpop.permute.xlu0 %56
    %v60 = vlaneseq
    %v61 = vshrl.u32 %v60, 7
    %v62 = vsub.s32 0, %v61
    %v63 = vrot.slane %v53, %v62
    %v65 = vmul.f32 %v57, %v63
    %v66 = vand.u32 2147483647, %v65
    %vm67 = vcmp.le.f32.partialorder %v66, 0.7853982
    %vm68 = vcmp.lt.s32.totalorder %v65, 0
    %v69 = vand.u32 %v65, 2139095040
    %v70 = vshrl.u32 %v69, 23
    %v71 = vsub.s32 %v70, 127
    %v72 = vand.u32 2147483647, %v65
    %v73 = vand.u32 %v72, 8388607
    %v74 = vor.u32 %v73, 8388608
    %v75 = vsub.s32 0, %v74
    %v76 = vadd.s32 %v71, 1
    %vm77 = vcmp.gt.s32.totalorder %v76, 0
    %v78 = vsel %vm77, %v76, 0
    %v79 = vshrl.u32 %v78, 5
    %v80 = vand.u32 %v78, 31
    %v81 = vsub.s32 32, %v80
    %v82 = vshrl.u32 683565275, %v81
    %v83 = vshll.u32 683565275, %v80
    %v84 = vshrl.u32 2475754826, %v81
    %v85 = vor.u32 %v83, %v84
    %v86 = vshll.u32 2475754826, %v80
    %v87 = vshrl.u32 2131351028, %v81
    %v88 = vor.u32 %v86, %v87
    %v89 = vshll.u32 2131351028, %v80
    %v90 = vshrl.u32 2102212464, %v81
    %v91 = vor.u32 %v89, %v90
    %v92 = vshll.u32 2102212464, %v80
    %v93 = vshrl.u32 920167782, %v81
    %v94 = vor.u32 %v92, %v93
    %v95 = vshll.u32 920167782, %v80
    %v96 = vshrl.u32 1326507024, %v81
    %v97 = vor.u32 %v95, %v96
    %vm98 = vcmp.lt.s32.totalorder %v79, 1
    %vm99 = vcmp.lt.s32.totalorder %v79, 2
    %vm100 = vcmp.lt.s32.totalorder %v79, 3
    %vm101 = vcmp.lt.s32.totalorder %v79, 4
    %v102 = vsel %vm98, %v82, %v85
    %v103 = vsel %vm101, %v91, 2102212464
    %v104 = vsel %vm100, %v88, %v103
    %v105 = vsel %vm99, %v102, %v104
    %v106 = vsel %vm98, %v85, %v88
    %v107 = vsel %vm101, %v94, 920167782
    %v108 = vsel %vm100, %v91, %v107
    %v109 = vsel %vm99, %v106, %v108
    %v110 = vsel %vm98, %v88, %v91
    %v111 = vsel %vm101, %v97, 1326507024
    %v112 = vsel %vm100, %v94, %v111
    %v113 = vsel %vm99, %v110, %v112
    %v114 = vshll.u32 %v74, 8
    %v115 = vmul.u32.u64.compose %v114, %v113
    %v116 = vextract.low.u32 %v115
    %v117 = vextract.high.u32 %v115
    %v118 = vmul.u32.u64.compose %v114, %v109
    %v119 = vextract.low.u32 %v118
    %v120 = vextract.high.u32 %v118
    %v121 = vmul.u32 %v114, %v105
    %v122 = vadd.s32 %v117, %v119
    %vm123 = vc.u32 %v117, %v119
    %v124 = vadd.s32 %v120, 1
    %v125 = vsel %vm123, %v124, %v120
    %v126 = vadd.s32 %v121, %v125
    %v127 = vadd.s32 %v126, 536870912
    %v128 = vshrl.u32 %v127, 30
    %v129 = vshll.u32 %v128, 30
    %v130 = vsub.s32 %v126, %v129
    %vm131 = vcmp.lt.s32.totalorder %v130, 0
    %v132 = vsub.s32 0, %v130
    %v133 = vsel %vm131, %v132, %v130
    %v134 = vclz %v133
    %v135 = vsub.s32 %v134, 2
    %vm136 = vcmp.gt.s32.totalorder 0, %v135
    %v137 = vsel %vm136, 0, %v135
    %v138 = vsub.s32 32, %v137
    %v139 = vshll.u32 %v130, %v137
    %v140 = vshrl.u32 %v122, %v138
    %v141 = vor.u32 %v139, %v140
    %v142 = vsub.s32 4294967266, %v137
    %v143 = vadd.s32 %v142, 127
    %v144 = vshll.u32 %v143, 23
    %v145 = vor.u32 4788187, %v144
    %v146 = vand.u32 2147483647, %v145
    %v148 = vcvt.s32.f32 %v141
    %v149 = vmul.f32 %v148, %v146
    %v150 = vxor.u32 %v149, 2147483648
    %v151 = vsel %vm68, %v150, %v149
    %v152 = vsub.s32 4, %v128
    %v153 = vsel %vm68, %v152, %v128
    %v154 = vsel %vm67, %v65, %v151
    %v155 = vsel %vm67, 0, %v153
    %v156 = vcosq.f32.pop %v154
    %v157 = vsinq.f32.pop %v154
    %vm158 = vweird.f32 %v65
    %v159 = vadd.s32 %v155, 3
    %v160 = vand.u32 %v159, 3
    %vm161 = vcmp.lt.s32.totalorder %v160, 2
    %vm162 = vcmp.eq.s32.totalorder %v160, 0
    %v163 = vxor.u32 %v157, 2147483648
    %v164 = vsel %vm162, %v156, %v163
    %vm165 = vcmp.eq.s32.totalorder %v160, 2
    %v166 = vxor.u32 %v156, 2147483648
    %v167 = vsel %vm165, %v166, %v157
    %v168 = vsel %vm161, %v164, %v167
    %v169 = vsel %vm158, nan, %v168
    %v170 = vand.u32 2147483647, %v65
    %vm171 = vcmp.le.f32.partialorder %v170, 0.7853982
    %vm172 = vcmp.lt.s32.totalorder %v65, 0
    %v173 = vand.u32 %v65, 2139095040
    %v174 = vshrl.u32 %v173, 23
    %v175 = vsub.s32 %v174, 127
    %v176 = vand.u32 2147483647, %v65
    %v177 = vand.u32 %v176, 8388607
    %v178 = vor.u32 %v177, 8388608
    %v179 = vsub.s32 0, %v178
    %v180 = vadd.s32 %v175, 1
    %vm181 = vcmp.gt.s32.totalorder %v180, 0
    %v182 = vsel %vm181, %v180, 0
    %v183 = vshrl.u32 %v182, 5
    %v184 = vand.u32 %v182, 31
    %v185 = vsub.s32 32, %v184
    %v186 = vshrl.u32 683565275, %v185
    %v187 = vshll.u32 683565275, %v184
    %v188 = vshrl.u32 2475754826, %v185
    %v189 = vor.u32 %v187, %v188
    %v190 = vshll.u32 2475754826, %v184
    %v191 = vshrl.u32 2131351028, %v185
    %v192 = vor.u32 %v190, %v191
    %v193 = vshll.u32 2131351028, %v184
    %v194 = vshrl.u32 2102212464, %v185
    %v195 = vor.u32 %v193, %v194
    %v196 = vshll.u32 2102212464, %v184
    %v197 = vshrl.u32 920167782, %v185
    %v198 = vor.u32 %v196, %v197
    %v199 = vshll.u32 920167782, %v184
    %v200 = vshrl.u32 1326507024, %v185
    %v201 = vor.u32 %v199, %v200
    %vm202 = vcmp.lt.s32.totalorder %v183, 1
    %vm203 = vcmp.lt.s32.totalorder %v183, 2
    %vm204 = vcmp.lt.s32.totalorder %v183, 3
    %vm205 = vcmp.lt.s32.totalorder %v183, 4
    %v206 = vsel %vm202, %v186, %v189
    %v207 = vsel %vm205, %v195, 2102212464
    %v208 = vsel %vm204, %v192, %v207
    %v209 = vsel %vm203, %v206, %v208
    %v210 = vsel %vm202, %v189, %v192
    %v211 = vsel %vm205, %v198, 920167782
    %v212 = vsel %vm204, %v195, %v211
    %v213 = vsel %vm203, %v210, %v212
    %v214 = vsel %vm202, %v192, %v195
    %v215 = vsel %vm205, %v201, 1326507024
    %v216 = vsel %vm204, %v198, %v215
    %v217 = vsel %vm203, %v214, %v216
    %v218 = vshll.u32 %v178, 8
    %v219 = vmul.u32.u64.compose %v218, %v217
    %v220 = vextract.low.u32 %v219
    %v221 = vextract.high.u32 %v219
    %v222 = vmul.u32.u64.compose %v218, %v213
    %v223 = vextract.low.u32 %v222
    %v224 = vextract.high.u32 %v222
    %v225 = vmul.u32 %v218, %v209
    %v226 = vadd.s32 %v221, %v223
    %vm227 = vc.u32 %v221, %v223
    %v228 = vadd.s32 %v224, 1
    %v229 = vsel %vm227, %v228, %v224
    %v230 = vadd.s32 %v225, %v229
    %v231 = vadd.s32 %v230, 536870912
    %v232 = vshrl.u32 %v231, 30
    %v233 = vshll.u32 %v232, 30
    %v234 = vsub.s32 %v230, %v233
    %vm235 = vcmp.lt.s32.totalorder %v234, 0
    %v236 = vsub.s32 0, %v234
    %v237 = vsel %vm235, %v236, %v234
    %v238 = vclz %v237
    %v239 = vsub.s32 %v238, 2
    %vm240 = vcmp.gt.s32.totalorder 0, %v239
    %v241 = vsel %vm240, 0, %v239
    %v242 = vsub.s32 32, %v241
    %v243 = vshll.u32 %v234, %v241
    %v244 = vshrl.u32 %v226, %v242
    %v245 = vor.u32 %v243, %v244
    %v246 = vsub.s32 4294967266, %v241
    %v247 = vadd.s32 %v246, 127
    %v248 = vshll.u32 %v247, 23
    %v249 = vor.u32 4788187, %v248
    %v250 = vand.u32 2147483647, %v249
    %v252 = vcvt.s32.f32 %v245
    %v253 = vmul.f32 %v252, %v250
    %v254 = vxor.u32 %v253, 2147483648
    %v255 = vsel %vm172, %v254, %v253
    %v256 = vsub.s32 4, %v232
    %v257 = vsel %vm172, %v256, %v232
    %v258 = vsel %vm171, %v65, %v255
    %v259 = vsel %vm171, 0, %v257
    %v260 = vcosq.f32.pop %v258
    %v261 = vsinq.f32.pop %v258
    %vm262 = vweird.f32 %v65
    %v263 = vand.u32 %v259, 3
    %vm264 = vcmp.lt.s32.totalorder %v263, 2
    %vm265 = vcmp.eq.s32.totalorder %v263, 0
    %v266 = vxor.u32 %v261, 2147483648
    %v267 = vsel %vm265, %v260, %v266
    %vm268 = vcmp.eq.s32.totalorder %v263, 2
    %v269 = vxor.u32 %v260, 2147483648
    %v270 = vsel %vm268, %v269, %v261
    %v271 = vsel %vm264, %v267, %v270
    %v272 = vsel %vm262, nan, %v271
    %v273 = vld [vmem:[#allocation2] sm:$0xff]
    %v274 = vld [vmem:[#allocation2 + $0x8] sm:$0xff]
    %v275 = vld [vmem:[#allocation2 + $0x10] sm:$0xff]
    %v276 = vld [vmem:[#allocation2 + $0x18] sm:$0xff]
    %v277 = vld [vmem:[#allocation2 + $0x20] sm:$0xff]
    %v278 = vld [vmem:[#allocation2 + $0x28] sm:$0xff]
    %v279 = vld [vmem:[#allocation2 + $0x30] sm:$0xff]
    %v280 = vld [vmem:[#allocation2 + $0x38] sm:$0xff]
    %v281 = vld [vmem:[#allocation2 + $0x40] sm:$0xff]
    %v282 = vld [vmem:[#allocation2 + $0x48] sm:$0xff]
    %v283 = vld [vmem:[#allocation2 + $0x50] sm:$0xff]
    %v284 = vld [vmem:[#allocation2 + $0x58] sm:$0xff]
    %v285 = vld [vmem:[#allocation2 + $0x60] sm:$0xff]
    %v286 = vld [vmem:[#allocation2 + $0x68] sm:$0xff]
    %v287 = vld [vmem:[#allocation2 + $0x70] sm:$0xff]
    %v288 = vld [vmem:[#allocation2 + $0x78] sm:$0xff]
    %v289 = vld [vmem:[#allocation2 + $0x80] sm:$0xff]
    %v290 = vld [vmem:[#allocation2 + $0x88] sm:$0xff]
    %v291 = vld [vmem:[#allocation2 + $0x90] sm:$0xff]
    %v292 = vld [vmem:[#allocation2 + $0x98] sm:$0xff]
    %v293 = vld [vmem:[#allocation2 + $0xa0] sm:$0xff]
    %v294 = vld [vmem:[#allocation2 + $0xa8] sm:$0xff]
    %v295 = vld [vmem:[#allocation2 + $0xb0] sm:$0xff]
    %v296 = vld [vmem:[#allocation2 + $0xb8] sm:$0xff]
    %v297 = vld [vmem:[#allocation2 + $0xc0] sm:$0xff]
    %v298 = vld [vmem:[#allocation2 + $0xc8] sm:$0xff]
    %v299 = vld [vmem:[#allocation2 + $0xd0] sm:$0xff]
    %v300 = vld [vmem:[#allocation2 + $0xd8] sm:$0xff]
    %v301 = vld [vmem:[#allocation2 + $0xe0] sm:$0xff]
    %v302 = vld [vmem:[#allocation2 + $0xe8] sm:$0xff]
    %v303 = vld [vmem:[#allocation2 + $0xf0] sm:$0xff]
    %v304 = vld [vmem:[#allocation2 + $0xf8] sm:$0xff]
    %v305 = vld [vmem:[#allocation2 + $0x100] sm:$0xff]
    %v306 = vld [vmem:[#allocation2 + $0x108] sm:$0xff]
    %v307 = vld [vmem:[#allocation2 + $0x110] sm:$0xff]
    %v308 = vld [vmem:[#allocation2 + $0x118] sm:$0xff]
    %v309 = vld [vmem:[#allocation2 + $0x120] sm:$0xff]
    %v310 = vld [vmem:[#allocation2 + $0x128] sm:$0xff]
    %v311 = vld [vmem:[#allocation2 + $0x130] sm:$0xff]
    %v312 = vld [vmem:[#allocation2 + $0x138] sm:$0xff]
    %v313 = vld [vmem:[#allocation2 + $0x140] sm:$0xff]
    %v314 = vld [vmem:[#allocation2 + $0x148] sm:$0xff]
    %v315 = vld [vmem:[#allocation2 + $0x150] sm:$0xff]
    %v316 = vld [vmem:[#allocation2 + $0x158] sm:$0xff]
    %v317 = vld [vmem:[#allocation2 + $0x160] sm:$0xff]
    %v318 = vld [vmem:[#allocation2 + $0x168] sm:$0xff]
    %v319 = vld [vmem:[#allocation2 + $0x170] sm:$0xff]
    %v320 = vld [vmem:[#allocation2 + $0x178] sm:$0xff]
    %v321 = vld [vmem:[#allocation2 + $0x180] sm:$0xff]
    %v322 = vld [vmem:[#allocation2 + $0x188] sm:$0xff]
    %v323 = vld [vmem:[#allocation2 + $0x190] sm:$0xff]
    %v324 = vld [vmem:[#allocation2 + $0x198] sm:$0xff]
    %v325 = vld [vmem:[#allocation2 + $0x1a0] sm:$0xff]
    %v326 = vld [vmem:[#allocation2 + $0x1a8] sm:$0xff]
    %v327 = vld [vmem:[#allocation2 + $0x1b0] sm:$0xff]
    %v328 = vld [vmem:[#allocation2 + $0x1b8] sm:$0xff]
    %v329 = vld [vmem:[#allocation2 + $0x1c0] sm:$0xff]
    %v330 = vld [vmem:[#allocation2 + $0x1c8] sm:$0xff]
    %v331 = vld [vmem:[#allocation2 + $0x1d0] sm:$0xff]
    %v332 = vld [vmem:[#allocation2 + $0x1d8] sm:$0xff]
    %v333 = vld [vmem:[#allocation2 + $0x1e0] sm:$0xff]
    %v334 = vld [vmem:[#allocation2 + $0x1e8] sm:$0xff]
    %v335 = vld [vmem:[#allocation2 + $0x1f0] sm:$0xff]
    %v336 = vld [vmem:[#allocation2 + $0x1f8] sm:$0xff]
    %v337 = vld [vmem:[#allocation2 + $0x200] sm:$0xff]
    %v338 = vld [vmem:[#allocation2 + $0x208] sm:$0xff]
    %v339 = vld [vmem:[#allocation2 + $0x210] sm:$0xff]
    %v340 = vld [vmem:[#allocation2 + $0x218] sm:$0xff]
    %v341 = vld [vmem:[#allocation2 + $0x220] sm:$0xff]
    %v342 = vld [vmem:[#allocation2 + $0x228] sm:$0xff]
    %v343 = vld [vmem:[#allocation2 + $0x230] sm:$0xff]
    %v344 = vld [vmem:[#allocation2 + $0x238] sm:$0xff]
    %v345 = vld [vmem:[#allocation2 + $0x240] sm:$0xff]
    %v346 = vld [vmem:[#allocation2 + $0x248] sm:$0xff]
    %v347 = vld [vmem:[#allocation2 + $0x250] sm:$0xff]
    %v348 = vld [vmem:[#allocation2 + $0x258] sm:$0xff]
    %v349 = vld [vmem:[#allocation2 + $0x260] sm:$0xff]
    %v350 = vld [vmem:[#allocation2 + $0x268] sm:$0xff]
    %v351 = vld [vmem:[#allocation2 + $0x270] sm:$0xff]
    %v352 = vld [vmem:[#allocation2 + $0x278] sm:$0xff]
    %v353 = vld [vmem:[#allocation2 + $0x280] sm:$0xff]
    %v354 = vld [vmem:[#allocation2 + $0x288] sm:$0xff]
    %v355 = vld [vmem:[#allocation2 + $0x290] sm:$0xff]
    %v356 = vld [vmem:[#allocation2 + $0x298] sm:$0xff]
    %v357 = vld [vmem:[#allocation2 + $0x2a0] sm:$0xff]
    %v358 = vld [vmem:[#allocation2 + $0x2a8] sm:$0xff]
    %v359 = vld [vmem:[#allocation2 + $0x2b0] sm:$0xff]
    %v360 = vld [vmem:[#allocation2 + $0x2b8] sm:$0xff]
    %v361 = vld [vmem:[#allocation2 + $0x2c0] sm:$0xff]
    %v362 = vld [vmem:[#allocation2 + $0x2c8] sm:$0xff]
    %v363 = vld [vmem:[#allocation2 + $0x2d0] sm:$0xff]
    %v364 = vld [vmem:[#allocation2 + $0x2d8] sm:$0xff]
    %v365 = vld [vmem:[#allocation2 + $0x2e0] sm:$0xff]
    %v366 = vld [vmem:[#allocation2 + $0x2e8] sm:$0xff]
    %v367 = vld [vmem:[#allocation2 + $0x2f0] sm:$0xff]
    %v368 = vld [vmem:[#allocation2 + $0x2f8] sm:$0xff]
    %v369 = vld [vmem:[#allocation2 + $0x300] sm:$0xff]
    %v370 = vld [vmem:[#allocation2 + $0x308] sm:$0xff]
    %v371 = vld [vmem:[#allocation2 + $0x310] sm:$0xff]
    %v372 = vld [vmem:[#allocation2 + $0x318] sm:$0xff]
    %v373 = vld [vmem:[#allocation2 + $0x320] sm:$0xff]
    %v374 = vld [vmem:[#allocation2 + $0x328] sm:$0xff]
    %v375 = vld [vmem:[#allocation2 + $0x330] sm:$0xff]
    %v376 = vld [vmem:[#allocation2 + $0x338] sm:$0xff]
    %v377 = vld [vmem:[#allocation2 + $0x340] sm:$0xff]
    %v378 = vld [vmem:[#allocation2 + $0x348] sm:$0xff]
    %v379 = vld [vmem:[#allocation2 + $0x350] sm:$0xff]
    %v380 = vld [vmem:[#allocation2 + $0x358] sm:$0xff]
    %v381 = vld [vmem:[#allocation2 + $0x360] sm:$0xff]
    %v382 = vld [vmem:[#allocation2 + $0x368] sm:$0xff]
    %v383 = vld [vmem:[#allocation2 + $0x370] sm:$0xff]
    %v384 = vld [vmem:[#allocation2 + $0x378] sm:$0xff]
    %v385 = vld [vmem:[#allocation2 + $0x380] sm:$0xff]
    %v386 = vld [vmem:[#allocation2 + $0x388] sm:$0xff]
    %v387 = vld [vmem:[#allocation2 + $0x390] sm:$0xff]
    %v388 = vld [vmem:[#allocation2 + $0x398] sm:$0xff]
    %v389 = vld [vmem:[#allocation2 + $0x3a0] sm:$0xff]
    %v390 = vld [vmem:[#allocation2 + $0x3a8] sm:$0xff]
    %v391 = vld [vmem:[#allocation2 + $0x3b0] sm:$0xff]
    %v392 = vld [vmem:[#allocation2 + $0x3b8] sm:$0xff]
    %v393 = vld [vmem:[#allocation2 + $0x3c0] sm:$0xff]
    %v394 = vld [vmem:[#allocation2 + $0x3c8] sm:$0xff]
    %v395 = vld [vmem:[#allocation2 + $0x3d0] sm:$0xff]
    %v396 = vld [vmem:[#allocation2 + $0x3d8] sm:$0xff]
    %v397 = vld [vmem:[#allocation2 + $0x3e0] sm:$0xff]
    %v398 = vld [vmem:[#allocation2 + $0x3e8] sm:$0xff]
    %v399 = vld [vmem:[#allocation2 + $0x3f0] sm:$0xff]
    %v400 = vld [vmem:[#allocation2 + $0x3f8] sm:$0xff]
    %v401 = vld [vmem:[%s3] sm:$0xf]
    %v403 = vlaneseq
    %v404 = vshrl.u32 %v403, 7
    %v405 = vsub.s32 0, %v404
    %v406 = vrot.slane %v401, %v405
    %v407 = vlaneseq
    %v408 = vshrl.u32 %v407, 7
    %v409 = vsub.s32 1, %v408
    %v410 = vrot.slane %v401, %v409
    %v411 = vlaneseq
    %v412 = vshrl.u32 %v411, 7
    %v413 = vsub.s32 2, %v412
    %v414 = vrot.slane %v401, %v413
    %v415 = vlaneseq
    %v416 = vshrl.u32 %v415, 7
    %v417 = vsub.s32 3, %v416
    %v418 = vrot.slane %v401, %v417
    %423 = vmatprep.subr.mxu0 %v274
    %424 = vmatpush1.msra.mxu0 %v273
    %425 = vmatprep.subr.mxu0 %v278
    %426 = vmatpush1.msra.mxu0 %v277
    %427 = vmatprep.subr.mxu0 %v282
    %428 = vmatpush1.msra.mxu0 %v281
    %429 = vmatprep.subr.mxu0 %v286
    %430 = vmatpush1.msra.mxu0 %v285
    %431 = vmatprep.subr.mxu0 %v290
    %432 = vmatpush1.msra.mxu0 %v289
    %433 = vmatprep.subr.mxu0 %v294
    %434 = vmatpush1.msra.mxu0 %v293
    %435 = vmatprep.subr.mxu0 %v298
    %436 = vmatpush1.msra.mxu0 %v297
    %437 = vmatprep.subr.mxu0 %v302
    %438 = vmatpush1.msra.mxu0 %v301
    %439 = vmatprep.subr.mxu0 %v306
    %440 = vmatpush1.msra.mxu0 %v305
    %441 = vmatprep.subr.mxu0 %v310
    %442 = vmatpush1.msra.mxu0 %v309
    %443 = vmatprep.subr.mxu0 %v314
    %444 = vmatpush1.msra.mxu0 %v313
    %445 = vmatprep.subr.mxu0 %v318
    %446 = vmatpush1.msra.mxu0 %v317
    %447 = vmatprep.subr.mxu0 %v322
    %448 = vmatpush1.msra.mxu0 %v321
    %449 = vmatprep.subr.mxu0 %v326
    %450 = vmatpush1.msra.mxu0 %v325
    %451 = vmatprep.subr.mxu0 %v330
    %452 = vmatpush1.msra.mxu0 %v329
    %453 = vmatprep.subr.mxu0 %v334
    %454 = vmatpush1.msra.mxu0 %v333
    %455 = vmatprep.subr.mxu0 %v338
    %456 = vmatpush1.msra.mxu0 %v337
    %457 = vmatprep.subr.mxu0 %v342
    %458 = vmatpush1.msra.mxu0 %v341
    %459 = vmatprep.subr.mxu0 %v346
    %460 = vmatpush1.msra.mxu0 %v345
    %461 = vmatprep.subr.mxu0 %v350
    %462 = vmatpush1.msra.mxu0 %v349
    %463 = vmatprep.subr.mxu0 %v354
    %464 = vmatpush1.msra.mxu0 %v353
    %465 = vmatprep.subr.mxu0 %v358
    %466 = vmatpush1.msra.mxu0 %v357
    %467 = vmatprep.subr.mxu0 %v362
    %468 = vmatpush1.msra.mxu0 %v361
    %469 = vmatprep.subr.mxu0 %v366
    %470 = vmatpush1.msra.mxu0 %v365
    %471 = vmatprep.subr.mxu0 %v370
    %472 = vmatpush1.msra.mxu0 %v369
    %473 = vmatprep.subr.mxu0 %v374
    %474 = vmatpush1.msra.mxu0 %v373
    %475 = vmatprep.subr.mxu0 %v378
    %476 = vmatpush1.msra.mxu0 %v377
    %477 = vmatprep.subr.mxu0 %v382
    %478 = vmatpush1.msra.mxu0 %v381
    %479 = vmatprep.subr.mxu0 %v386
    %480 = vmatpush1.msra.mxu0 %v385
    %481 = vmatprep.subr.mxu0 %v390
    %482 = vmatpush1.msra.mxu0 %v389
    %483 = vmatprep.subr.mxu0 %v394
    %484 = vmatpush1.msra.mxu0 %v393
    %485 = vmatprep.subr.mxu0 %v398
    %486 = vmatpush1.msra.mxu0 %v397
    %487 = vmatprep.mubr.f32.mxu0 %v272
    %488 = vmatmul.mubr.f32.gmra.mrb[0].mxu0 %v169
    %v489 = vpop.f32.mrb[0].mxu0
    %v490 = vadd.f32 %v406, %v489
    %v491 = vpop.f32.mrb[0].mxu0
    %v492 = vadd.f32 %v410, %v491
    %493 = vdwg.mxu0
    %494 = vmatprep.subr.mxu0 %v276
    %495 = vmatpush1.msra.mxu0 %v275
    %496 = vmatprep.subr.mxu0 %v280
    %497 = vmatpush1.msra.mxu0 %v279
    %498 = vmatprep.subr.mxu0 %v284
    %499 = vmatpush1.msra.mxu0 %v283
    %500 = vmatprep.subr.mxu0 %v288
    %501 = vmatpush1.msra.mxu0 %v287
    %502 = vmatprep.subr.mxu0 %v292
    %503 = vmatpush1.msra.mxu0 %v291
    %504 = vmatprep.subr.mxu0 %v296
    %505 = vmatpush1.msra.mxu0 %v295
    %506 = vmatprep.subr.mxu0 %v300
    %507 = vmatpush1.msra.mxu0 %v299
    %508 = vmatprep.subr.mxu0 %v304
    %509 = vmatpush1.msra.mxu0 %v303
    %510 = vmatprep.subr.mxu0 %v308
    %511 = vmatpush1.msra.mxu0 %v307
    %512 = vmatprep.subr.mxu0 %v312
    %513 = vmatpush1.msra.mxu0 %v311
    %514 = vmatprep.subr.mxu0 %v316
    %515 = vmatpush1.msra.mxu0 %v315
    %516 = vmatprep.subr.mxu0 %v320
    %517 = vmatpush1.msra.mxu0 %v319
    %518 = vmatprep.subr.mxu0 %v324
    %519 = vmatpush1.msra.mxu0 %v323
    %520 = vmatprep.subr.mxu0 %v328
    %521 = vmatpush1.msra.mxu0 %v327
    %522 = vmatprep.subr.mxu0 %v332
    %523 = vmatpush1.msra.mxu0 %v331
    %524 = vmatprep.subr.mxu0 %v336
    %525 = vmatpush1.msra.mxu0 %v335
    %526 = vmatprep.subr.mxu0 %v340
    %527 = vmatpush1.msra.mxu0 %v339
    %528 = vmatprep.subr.mxu0 %v344
    %529 = vmatpush1.msra.mxu0 %v343
    %530 = vmatprep.subr.mxu0 %v348
    %531 = vmatpush1.msra.mxu0 %v347
    %532 = vmatprep.subr.mxu0 %v352
    %533 = vmatpush1.msra.mxu0 %v351
    %534 = vmatprep.subr.mxu0 %v356
    %535 = vmatpush1.msra.mxu0 %v355
    %536 = vmatprep.subr.mxu0 %v360
    %537 = vmatpush1.msra.mxu0 %v359
    %538 = vmatprep.subr.mxu0 %v364
    %539 = vmatpush1.msra.mxu0 %v363
    %540 = vmatprep.subr.mxu0 %v368
    %541 = vmatpush1.msra.mxu0 %v367
    %542 = vmatprep.subr.mxu0 %v372
    %543 = vmatpush1.msra.mxu0 %v371
    %544 = vmatprep.subr.mxu0 %v376
    %545 = vmatpush1.msra.mxu0 %v375
    %546 = vmatprep.subr.mxu0 %v380
    %547 = vmatpush1.msra.mxu0 %v379
    %548 = vmatprep.subr.mxu0 %v384
    %549 = vmatpush1.msra.mxu0 %v383
    %550 = vmatprep.subr.mxu0 %v388
    %551 = vmatpush1.msra.mxu0 %v387
    %552 = vmatprep.subr.mxu0 %v392
    %553 = vmatpush1.msra.mxu0 %v391
    %554 = vmatprep.subr.mxu0 %v396
    %555 = vmatpush1.msra.mxu0 %v395
    %556 = vmatprep.subr.mxu0 %v400
    %557 = vmatpush1.msra.mxu0 %v399
    %558 = vmatprep.mubr.f32.mxu0 %v272
    %559 = vmatmul.mubr.f32.gmra.mrb[0].mxu0 %v169
    %v560 = vpop.f32.mrb[0].mxu0
    %v561 = vadd.f32 %v414, %v560
    %v562 = vpop.f32.mrb[0].mxu0
    %v563 = vadd.f32 %v418, %v562
    %564 = vdwg.mxu0
    %v565 = vmul.f32 %v490, 0.5
    %v566 = vmul.f32 %v492, 0.5
    %v567 = vmul.f32 %v561, 0.5
    %v568 = vmul.f32 %v563, 0.5
    %v569 = vmul.f32 %v490, 0.70710677
    %v570 = vmul.f32 %v492, 0.70710677
    %v571 = vmul.f32 %v561, 0.70710677
    %v572 = vmul.f32 %v563, 0.70710677
    %v573 = verf.f32.pop %v569
    %v574 = verf.f32.pop %v570
    %v575 = verf.f32.pop %v571
    %v576 = verf.f32.pop %v572
    %v577 = vadd.f32 %v573, 1.0
    %v578 = vadd.f32 %v574, 1.0
    %v579 = vadd.f32 %v575, 1.0
    %v580 = vadd.f32 %v576, 1.0
    %v581 = vmul.f32 %v565, %v577
    %v582 = vmul.f32 %v566, %v578
    %v583 = vmul.f32 %v567, %v579
    %v584 = vmul.f32 %v568, %v580
    %v585 = vld [vmem:[#allocation5] sm:$0xff]
    %v586 = vld [vmem:[#allocation5 + $0x8] sm:$0xff]
    %v587 = vld [vmem:[#allocation5 + $0x10] sm:$0xff]
    %v588 = vld [vmem:[#allocation5 + $0x18] sm:$0xff]
    %v589 = vld [vmem:[#allocation5 + $0x20] sm:$0xff]
    %v590 = vld [vmem:[#allocation5 + $0x28] sm:$0xff]
    %v591 = vld [vmem:[#allocation5 + $0x30] sm:$0xff]
    %v592 = vld [vmem:[#allocation5 + $0x38] sm:$0xff]
    %v593 = vld [vmem:[#allocation5 + $0x40] sm:$0xff]
    %v594 = vld [vmem:[#allocation5 + $0x48] sm:$0xff]
    %v595 = vld [vmem:[#allocation5 + $0x50] sm:$0xff]
    %v596 = vld [vmem:[#allocation5 + $0x58] sm:$0xff]
    %v597 = vld [vmem:[#allocation5 + $0x60] sm:$0xff]
    %v598 = vld [vmem:[#allocation5 + $0x68] sm:$0xff]
    %v599 = vld [vmem:[#allocation5 + $0x70] sm:$0xff]
    %v600 = vld [vmem:[#allocation5 + $0x78] sm:$0xff]
    %v601 = vld [vmem:[#allocation5 + $0x80] sm:$0xff]
    %v602 = vld [vmem:[#allocation5 + $0x88] sm:$0xff]
    %v603 = vld [vmem:[#allocation5 + $0x90] sm:$0xff]
    %v604 = vld [vmem:[#allocation5 + $0x98] sm:$0xff]
    %v605 = vld [vmem:[#allocation5 + $0xa0] sm:$0xff]
    %v606 = vld [vmem:[#allocation5 + $0xa8] sm:$0xff]
    %v607 = vld [vmem:[#allocation5 + $0xb0] sm:$0xff]
    %v608 = vld [vmem:[#allocation5 + $0xb8] sm:$0xff]
    %v609 = vld [vmem:[#allocation5 + $0xc0] sm:$0xff]
    %v610 = vld [vmem:[#allocation5 + $0xc8] sm:$0xff]
    %v611 = vld [vmem:[#allocation5 + $0xd0] sm:$0xff]
    %v612 = vld [vmem:[#allocation5 + $0xd8] sm:$0xff]
    %v613 = vld [vmem:[#allocation5 + $0xe0] sm:$0xff]
    %v614 = vld [vmem:[#allocation5 + $0xe8] sm:$0xff]
    %v615 = vld [vmem:[#allocation5 + $0xf0] sm:$0xff]
    %v616 = vld [vmem:[#allocation5 + $0xf8] sm:$0xff]
    %v617 = vld [vmem:[#allocation5 + $0x100] sm:$0xff]
    %v618 = vld [vmem:[#allocation5 + $0x108] sm:$0xff]
    %v619 = vld [vmem:[#allocation5 + $0x110] sm:$0xff]
    %v620 = vld [vmem:[#allocation5 + $0x118] sm:$0xff]
    %v621 = vld [vmem:[#allocation5 + $0x120] sm:$0xff]
    %v622 = vld [vmem:[#allocation5 + $0x128] sm:$0xff]
    %v623 = vld [vmem:[#allocation5 + $0x130] sm:$0xff]
    %v624 = vld [vmem:[#allocation5 + $0x138] sm:$0xff]
    %v625 = vld [vmem:[#allocation5 + $0x140] sm:$0xff]
    %v626 = vld [vmem:[#allocation5 + $0x148] sm:$0xff]
    %v627 = vld [vmem:[#allocation5 + $0x150] sm:$0xff]
    %v628 = vld [vmem:[#allocation5 + $0x158] sm:$0xff]
    %v629 = vld [vmem:[#allocation5 + $0x160] sm:$0xff]
    %v630 = vld [vmem:[#allocation5 + $0x168] sm:$0xff]
    %v631 = vld [vmem:[#allocation5 + $0x170] sm:$0xff]
    %v632 = vld [vmem:[#allocation5 + $0x178] sm:$0xff]
    %v633 = vld [vmem:[#allocation5 + $0x180] sm:$0xff]
    %v634 = vld [vmem:[#allocation5 + $0x188] sm:$0xff]
    %v635 = vld [vmem:[#allocation5 + $0x190] sm:$0xff]
    %v636 = vld [vmem:[#allocation5 + $0x198] sm:$0xff]
    %v637 = vld [vmem:[#allocation5 + $0x1a0] sm:$0xff]
    %v638 = vld [vmem:[#allocation5 + $0x1a8] sm:$0xff]
    %v639 = vld [vmem:[#allocation5 + $0x1b0] sm:$0xff]
    %v640 = vld [vmem:[#allocation5 + $0x1b8] sm:$0xff]
    %v641 = vld [vmem:[#allocation5 + $0x1c0] sm:$0xff]
    %v642 = vld [vmem:[#allocation5 + $0x1c8] sm:$0xff]
    %v643 = vld [vmem:[#allocation5 + $0x1d0] sm:$0xff]
    %v644 = vld [vmem:[#allocation5 + $0x1d8] sm:$0xff]
    %v645 = vld [vmem:[#allocation5 + $0x1e0] sm:$0xff]
    %v646 = vld [vmem:[#allocation5 + $0x1e8] sm:$0xff]
    %v647 = vld [vmem:[#allocation5 + $0x1f0] sm:$0xff]
    %v648 = vld [vmem:[#allocation5 + $0x1f8] sm:$0xff]
    %v649 = vld [vmem:[%s5] sm:$0x1]
    %v651 = vlaneseq
    %v652 = vshrl.u32 %v651, 7
    %v653 = vsub.s32 0, %v652
    %v654 = vrot.slane %v649, %v653
    %656 = vmatprep.subr.mxu0 0.0
    %657 = vmatpush1.msra.mxu0 %v585
    %658 = vmatprep.subr.mxu0 0.0
    %659 = vmatpush1.msra.mxu0 %v586
    %660 = vmatprep.subr.mxu0 0.0
    %661 = vmatpush1.msra.mxu0 %v587
    %662 = vmatprep.subr.mxu0 0.0
    %663 = vmatpush1.msra.mxu0 %v588
    %664 = vmatprep.subr.mxu0 0.0
    %665 = vmatpush1.msra.mxu0 %v589
    %666 = vmatprep.subr.mxu0 0.0
    %667 = vmatpush1.msra.mxu0 %v590
    %668 = vmatprep.subr.mxu0 0.0
    %669 = vmatpush1.msra.mxu0 %v591
    %670 = vmatprep.subr.mxu0 0.0
    %671 = vmatpush1.msra.mxu0 %v592
    %672 = vmatprep.subr.mxu0 0.0
    %673 = vmatpush1.msra.mxu0 %v593
    %674 = vmatprep.subr.mxu0 0.0
    %675 = vmatpush1.msra.mxu0 %v594
    %676 = vmatprep.subr.mxu0 0.0
    %677 = vmatpush1.msra.mxu0 %v595
    %678 = vmatprep.subr.mxu0 0.0
    %679 = vmatpush1.msra.mxu0 %v596
    %680 = vmatprep.subr.mxu0 0.0
    %681 = vmatpush1.msra.mxu0 %v597
    %682 = vmatprep.subr.mxu0 0.0
    %683 = vmatpush1.msra.mxu0 %v598
    %684 = vmatprep.subr.mxu0 0.0
    %685 = vmatpush1.msra.mxu0 %v599
    %686 = vmatprep.subr.mxu0 0.0
    %687 = vmatpush1.msra.mxu0 %v600
    %688 = vmatprep.subr.mxu0 0.0
    %689 = vmatpush1.msra.mxu0 %v601
    %690 = vmatprep.subr.mxu0 0.0
    %691 = vmatpush1.msra.mxu0 %v602
    %692 = vmatprep.subr.mxu0 0.0
    %693 = vmatpush1.msra.mxu0 %v603
    %694 = vmatprep.subr.mxu0 0.0
    %695 = vmatpush1.msra.mxu0 %v604
    %696 = vmatprep.subr.mxu0 0.0
    %697 = vmatpush1.msra.mxu0 %v605
    %698 = vmatprep.subr.mxu0 0.0
    %699 = vmatpush1.msra.mxu0 %v606
    %700 = vmatprep.subr.mxu0 0.0
    %701 = vmatpush1.msra.mxu0 %v607
    %702 = vmatprep.subr.mxu0 0.0
    %703 = vmatpush1.msra.mxu0 %v608
    %704 = vmatprep.subr.mxu0 0.0
    %705 = vmatpush1.msra.mxu0 %v609
    %706 = vmatprep.subr.mxu0 0.0
    %707 = vmatpush1.msra.mxu0 %v610
    %708 = vmatprep.subr.mxu0 0.0
    %709 = vmatpush1.msra.mxu0 %v611
    %710 = vmatprep.subr.mxu0 0.0
    %711 = vmatpush1.msra.mxu0 %v612
    %712 = vmatprep.subr.mxu0 0.0
    %713 = vmatpush1.msra.mxu0 %v613
    %714 = vmatprep.subr.mxu0 0.0
    %715 = vmatpush1.msra.mxu0 %v614
    %716 = vmatprep.subr.mxu0 0.0
    %717 = vmatpush1.msra.mxu0 %v615
    %718 = vmatprep.subr.mxu0 0.0
    %719 = vmatpush1.msra.mxu0 %v616
    %720 = vmatprep.mubr.f32.mxu0 %v582
    %721 = vmatmul.mubr.f32.gmra.mrb[0].mxu0 %v581
    %v722 = vpop.f32.mrb[0].mxu0
    %v723 = vadd.f32 %v654, %v722
    %v724 = vpop.f32.mrb[0].mxu0
    %725 = vdwg.mxu0
    %726 = vmatprep.subr.mxu0 0.0
    %727 = vmatpush1.msra.mxu0 %v617
    %728 = vmatprep.subr.mxu0 0.0
    %729 = vmatpush1.msra.mxu0 %v618
    %730 = vmatprep.subr.mxu0 0.0
    %731 = vmatpush1.msra.mxu0 %v619
    %732 = vmatprep.subr.mxu0 0.0
    %733 = vmatpush1.msra.mxu0 %v620
    %734 = vmatprep.subr.mxu0 0.0
    %735 = vmatpush1.msra.mxu0 %v621
    %736 = vmatprep.subr.mxu0 0.0
    %737 = vmatpush1.msra.mxu0 %v622
    %738 = vmatprep.subr.mxu0 0.0
    %739 = vmatpush1.msra.mxu0 %v623
    %740 = vmatprep.subr.mxu0 0.0
    %741 = vmatpush1.msra.mxu0 %v624
    %742 = vmatprep.subr.mxu0 0.0
    %743 = vmatpush1.msra.mxu0 %v625
    %744 = vmatprep.subr.mxu0 0.0
    %745 = vmatpush1.msra.mxu0 %v626
    %746 = vmatprep.subr.mxu0 0.0
    %747 = vmatpush1.msra.mxu0 %v627
    %748 = vmatprep.subr.mxu0 0.0
    %749 = vmatpush1.msra.mxu0 %v628
    %750 = vmatprep.subr.mxu0 0.0
    %751 = vmatpush1.msra.mxu0 %v629
    %752 = vmatprep.subr.mxu0 0.0
    %753 = vmatpush1.msra.mxu0 %v630
    %754 = vmatprep.subr.mxu0 0.0
    %755 = vmatpush1.msra.mxu0 %v631
    %756 = vmatprep.subr.mxu0 0.0
    %757 = vmatpush1.msra.mxu0 %v632
    %758 = vmatprep.subr.mxu0 0.0
    %759 = vmatpush1.msra.mxu0 %v633
    %760 = vmatprep.subr.mxu0 0.0
    %761 = vmatpush1.msra.mxu0 %v634
    %762 = vmatprep.subr.mxu0 0.0
    %763 = vmatpush1.msra.mxu0 %v635
    %764 = vmatprep.subr.mxu0 0.0
    %765 = vmatpush1.msra.mxu0 %v636
    %766 = vmatprep.subr.mxu0 0.0
    %767 = vmatpush1.msra.mxu0 %v637
    %768 = vmatprep.subr.mxu0 0.0
    %769 = vmatpush1.msra.mxu0 %v638
    %770 = vmatprep.subr.mxu0 0.0
    %771 = vmatpush1.msra.mxu0 %v639
    %772 = vmatprep.subr.mxu0 0.0
    %773 = vmatpush1.msra.mxu0 %v640
    %774 = vmatprep.subr.mxu0 0.0
    %775 = vmatpush1.msra.mxu0 %v641
    %776 = vmatprep.subr.mxu0 0.0
    %777 = vmatpush1.msra.mxu0 %v642
    %778 = vmatprep.subr.mxu0 0.0
    %779 = vmatpush1.msra.mxu0 %v643
    %780 = vmatprep.subr.mxu0 0.0
    %781 = vmatpush1.msra.mxu0 %v644
    %782 = vmatprep.subr.mxu0 0.0
    %783 = vmatpush1.msra.mxu0 %v645
    %784 = vmatprep.subr.mxu0 0.0
    %785 = vmatpush1.msra.mxu0 %v646
    %786 = vmatprep.subr.mxu0 0.0
    %787 = vmatpush1.msra.mxu0 %v647
    %788 = vmatprep.subr.mxu0 0.0
    %789 = vmatpush1.msra.mxu0 %v648
    %790 = vmatprep.mubr.f32.mxu0 %v584
    %791 = vmatmul.mubr.f32.gmra.mrb[0].mxu0 %v583
    %v792 = vpop.f32.mrb[0].mxu0
    %v793 = vadd.f32 %v723, %v792
    %v794 = vpop.f32.mrb[0].mxu0
    %795 = vdwg.mxu0
    %796 = vst [vmem:[#allocation7] sm:$0xff] %v793
    // Predicated region
    $region34: #{tpu_custom_call.1} parent=1 // pred_check
      _
    $region35: #{tpu_custom_call.1} parent=1 // pred_check_branch
      %798 = sbr.rel (0) target = $region37
    $region36: #{tpu_custom_call.1} parent=1 // pred_region
      %s800 = ssub.s32 128, 128
      %801 = vsyncadd [#allocation4], %s800
      %s803 = sshll.u32 [#allocation7], 4
      %s804 = int_to_ptr.vmem [resolvable:$true] %s803
      %806 = dma.vmem_to_hbm [thread:$0]  %s804, 128, %s6, [#allocation4]
    $region37: #{tpu_custom_call.1} parent=1 // pred_fallthru
      _
    // Predicated region
    $region38: #{tpu_custom_call.1} parent=1 // pred_check
      _
    $region39: #{tpu_custom_call.1} parent=1 // pred_check_branch
      %808 = sbr.rel (0) target = $region41
    $region40: #{tpu_custom_call.1} parent=1 // pred_region
      %809 = dma.done [#allocation4], 128
    $region41: #{tpu_custom_call.1} parent=1 // pred_fallthru
      _
    %810 = vsyncpa [#allocation3], 1
    %811 = vsyncpa [#allocation6], 1
    %812 = vsyncpa [#allocation4], 1

</llo_original>
